<compile_context>
chip_gen: v5e
topology: v5e:2x2
jax: 0.10.0
libtpu: 0.0.40
codegen_flags: <defaults>
</compile_context>

<pallas_src>
import functools

import jax
import jax.numpy as jnp
from jax.experimental import pallas as pl
from jax.experimental.pallas import tpu as pltpu


# ----------------------------------------------------------------------------
# Primary path: pure data-movement kernel (no MXU, no dtype casts).
# ----------------------------------------------------------------------------
def _upsample_copy_kernel(x_ref, o_ref, *, s):
    # x_ref: (BC, TH, W) block of input planes/rows, native dtype.
    # o_ref: (BC, TH*s*W*s) flattened (lane-dense) block of the output.
    x = x_ref[...]                              # native dtype, no casts
    bc, th, w = x.shape
    y = jnp.repeat(x, s, axis=2)                # column (lane) replication
    y = jnp.repeat(y, s, axis=1)                # row (sublane) replication
    # Flatten (TH*s, W*s) -> lane-dense last dim (multiple of 128 by
    # construction of the tiling), row-major order matches the output array.
    o_ref[...] = y.reshape(bc, th * s * w * s)


def _pick_tiles(P, H, W, s, itemsize, target_bytes=1 << 20):
    """Choose (plane_block, row_block) so the output tile is big (<=~1 MiB),
    blocks satisfy the (8,128)/full-dim rule, the flattened output block has a
    lane count that is a multiple of 128, and (if possible) the grid has >=2
    steps so both v7x TensorCores get work."""
    # plane-block candidates: P itself, or multiples of 8 dividing P
    bc_cands = sorted({P} | {d for d in range(8, P, 8) if P % d == 0})
    # row-block candidates: H itself, or multiples of 8 dividing H whose
    # flattened output width (th*s*W*s) is a multiple of 128 (lane-dense).
    th_cands = sorted({H} | {d for d in range(8, H, 8)
                             if H % d == 0 and (d * s * W * s) % 128 == 0})

    def out_bytes(bc, th):
        return bc * th * s * W * s * itemsize

    pairs = [(bc, th) for bc in bc_cands for th in th_cands]
    fits = [p for p in pairs if out_bytes(*p) <= target_bytes]
    if not fits:
        fits = [min(pairs, key=lambda p: out_bytes(*p))]
    multi = [p for p in fits if (P // p[0]) * (H // p[1]) >= 2]
    pool = multi or fits
    return max(pool, key=lambda p: out_bytes(*p))


def _upsample_copy(x, s):
    N, C, H, W = x.shape
    P, Ho, Wo = N * C, H * s, W * s
    bc, th = _pick_tiles(P, H, W, s, x.dtype.itemsize)
    L = th * s * W * s                       # flattened output block width

    x_flat = x.reshape(P, H, W)
    out_flat = pl.pallas_call(
        functools.partial(_upsample_copy_kernel, s=s),
        out_shape=jax.ShapeDtypeStruct((P, Ho * Wo), x.dtype),
        grid_spec=pltpu.PrefetchScalarGridSpec(
            num_scalar_prefetch=0,
            grid=(P // bc, H // th),
            in_specs=[pl.BlockSpec((bc, th, W), lambda i, j: (i, j, 0))],
            out_specs=pl.BlockSpec((bc, L), lambda i, j: (i, j)),
        ),
        compiler_params=pltpu.CompilerParams(
            dimension_semantics=("parallel", "parallel")),
    )(x_flat)
    # (P, Ho*Wo) row-major == (N, C, Ho, Wo) row-major: reshape is free.
    return out_flat.reshape(N, C, Ho, Wo)


# ----------------------------------------------------------------------------
# Fallback path (only used if the copy formulation fails to lower): the
# previously-verified exact 0/1 expansion-matrix MXU kernel.
# ----------------------------------------------------------------------------
def _upsample_mm_kernel(x_ref, eh_ref, ewt_ref, o_ref):
    x = x_ref[0].astype(jnp.float32)
    t = jnp.dot(eh_ref[...], x, preferred_element_type=jnp.float32)
    y = jnp.dot(t, ewt_ref[...], preferred_element_type=jnp.float32)
    o_ref[0] = y.astype(o_ref.dtype)


def _upsample_matmul(x, s):
    N, C, H, W = x.shape
    Ho, Wo = H * s, W * s
    eh = (jax.lax.broadcasted_iota(jnp.int32, (Ho, H), 0) // s ==
          jax.lax.broadcasted_iota(jnp.int32, (Ho, H), 1)).astype(jnp.float32)
    ewt = (jax.lax.broadcasted_iota(jnp.int32, (W, Wo), 1) // s ==
           jax.lax.broadcasted_iota(jnp.int32, (W, Wo), 0)).astype(jnp.float32)
    x_flat = x.reshape(N * C, H, W)
    out_flat = pl.pallas_call(
        _upsample_mm_kernel,
        out_shape=jax.ShapeDtypeStruct((N * C, Ho, Wo), x.dtype),
        grid_spec=pltpu.PrefetchScalarGridSpec(
            num_scalar_prefetch=0,
            grid=(N * C,),
            in_specs=[
                pl.BlockSpec((1, H, W), lambda i: (i, 0, 0)),
                pl.BlockSpec((Ho, H), lambda i: (0, 0)),
                pl.BlockSpec((W, Wo), lambda i: (0, 0)),
            ],
            out_specs=pl.BlockSpec((1, Ho, Wo), lambda i: (i, 0, 0)),
        ),
        compiler_params=pltpu.CompilerParams(
            dimension_semantics=("parallel",)),
    )(x_flat, eh, ewt)
    return out_flat.reshape(N, C, Ho, Wo)


# ----------------------------------------------------------------------------
# Public wrapper
# ----------------------------------------------------------------------------
def upsample_nearest(x, scale_factor):
    """x: (N, C, H, W) NCHW; returns (N, C, H*s, W*s), mode='nearest'."""
    s = int(scale_factor)
    if s != scale_factor or s < 1:
        # TODO(synk): non-integer nearest scale factors (floor(i*in/out) index
        # mapping) are not implemented.
        raise ValueError("only positive integer scale factors are supported")
    if s == 1:
        return x
    try:
        return _upsample_copy(x, s)
    except Exception:
        # Compatibility fallback: exact 0/1-matrix MXU formulation, used only
        # if the reshape-based copy path is rejected by the local Mosaic.
        return _upsample_matmul(x, s)


class UpSample:
    """JAX/Pallas equivalent of the PyTorch UpSample module (mode='nearest')."""

    def __init__(self, scale_factor, mode="nearest"):
        assert mode == "nearest", "only nearest mode implemented"
        self.scale_factor = scale_factor
        self.mode = mode

    def __call__(self, x):
        return upsample_nearest(x, self.scale_factor)


if __name__ == "__main__":
    key = jax.random.PRNGKey(0)
    N, C, H, W = 2, 4, 16, 16
    scale = 2
    x = jax.random.normal(key, (N, C, H, W), dtype=jnp.float32)

    model = UpSample(scale_factor=scale, mode="nearest")
    y = jax.block_until_ready(model(x))

    # reference: pure-JAX nearest upsample (repeat-interleave)
    y_ref = jnp.repeat(jnp.repeat(x, scale, axis=2), scale, axis=3)

    assert y.shape == (N, C, H * scale, W * scale), y.shape
    assert jnp.array_equal(y, y_ref), "mismatch vs reference nearest upsample"
    print("KERNEL_OK")
</pallas_src>

<mosaic_0001>
module attributes {stable_mosaic.version = 11 : i64} {
  func.func @_upsample_copy_kernel(%arg0: i32, %arg1: i32, %arg2: memref<8x8x16xf32, #tpu.memory_space<vmem>>, %arg3: memref<8x512xf32, #tpu.memory_space<vmem>>) attributes {dimension_semantics = [#tpu.dimension_semantics<parallel>, #tpu.dimension_semantics<parallel>], iteration_bounds = array<i64: 1, 2>, scalar_prefetch = 0 : i64, scratch_operands = 0 : i64, tpu.core_type = #tpu.core_type<tc>, window_params = [{transform_indices = @transform_0, window_bounds = array<i64: 8, 8, 16>}, {transform_indices = @transform_1, window_bounds = array<i64: 8, 512>}]} {
    %c0 = arith.constant 0 : index
    %c0_0 = arith.constant 0 : index
    %c0_1 = arith.constant 0 : index
    %0 = vector.load %arg2[%c0, %c0_0, %c0_1] : memref<8x8x16xf32, #tpu.memory_space<vmem>>, vector<8x8x16xf32>
    %1 = vector.shape_cast %0 : vector<8x8x16xf32> to vector<8x8x16x1xf32>
    %2 = vector.broadcast %1 : vector<8x8x16x1xf32> to vector<8x8x16x2xf32>
    %3 = vector.shape_cast %2 : vector<8x8x16x2xf32> to vector<8x8x32xf32>
    %4 = vector.shape_cast %3 : vector<8x8x32xf32> to vector<8x8x1x32xf32>
    %5 = vector.broadcast %4 : vector<8x8x1x32xf32> to vector<8x8x2x32xf32>
    %6 = vector.shape_cast %5 : vector<8x8x2x32xf32> to vector<8x16x32xf32>
    %7 = vector.shape_cast %6 : vector<8x16x32xf32> to vector<8x512xf32>
    %c0_2 = arith.constant 0 : index
    %c0_3 = arith.constant 0 : index
    %8 = vector.load %arg3[%c0_2, %c0_3] : memref<8x512xf32, #tpu.memory_space<vmem>>, vector<8x512xf32>
    tpu.vector_store %arg3[%c0_2, %c0_3], %7 {strides = array<i32>} : memref<8x512xf32, #tpu.memory_space<vmem>>, vector<8x512xf32>,
    return
  }
  func.func @transform_0(%arg0: i32, %arg1: i32) -> (i32, i32, i32) {
    %c0_i32 = arith.constant 0 : i32
    %c0_i32_0 = arith.constant 0 : i32
    return %arg0, %arg1, %c0_i32 : i32, i32, i32
  }
  func.func @transform_1(%arg0: i32, %arg1: i32) -> (i32, i32) {
    %c0_i32 = arith.constant 0 : i32
    return %arg0, %arg1 : i32, i32
  }
}

module attributes {stable_mosaic.version = 11 : i64} {
  func.func @_upsample_mm_kernel(%arg0: i32, %arg1: memref<1x16x16xf32, #tpu.memory_space<vmem>>, %arg2: memref<32x16xf32, #tpu.memory_space<vmem>>, %arg3: memref<16x32xf32, #tpu.memory_space<vmem>>, %arg4: memref<1x32x32xf32, #tpu.memory_space<vmem>>) attributes {dimension_semantics = [#tpu.dimension_semantics<parallel>], iteration_bounds = array<i64: 8>, scalar_prefetch = 0 : i64, scratch_operands = 0 : i64, tpu.core_type = #tpu.core_type<tc>, window_params = [{transform_indices = @transform_0, window_bounds = array<i64: 1, 16, 16>}, {pipeline_mode = #tpu.pipeline_mode<synchronous>, transform_indices = @transform_1, window_bounds = array<i64: 32, 16>}, {pipeline_mode = #tpu.pipeline_mode<synchronous>, transform_indices = @transform_2, window_bounds = array<i64: 16, 32>}, {transform_indices = @transform_3, window_bounds = array<i64: 1, 32, 32>}]} {
    %c0 = arith.constant 0 : index
    %c0_0 = arith.constant 0 : index
    %c0_1 = arith.constant 0 : index
    %0 = vector.load %arg1[%c0, %c0_0, %c0_1] : memref<1x16x16xf32, #tpu.memory_space<vmem>>, vector<1x16x16xf32>
    %1 = vector.shape_cast %0 : vector<1x16x16xf32> to vector<16x16xf32>
    %c0_2 = arith.constant 0 : index
    %c0_3 = arith.constant 0 : index
    %2 = vector.load %arg2[%c0_2, %c0_3] : memref<32x16xf32, #tpu.memory_space<vmem>>, vector<32x16xf32>
    %cst = arith.constant dense<0.000000e+00> : vector<32x16xf32>
    %3 = tpu.matmul %2, %1, %cst {dimension_numbers = #tpu.dot_dimension_numbers<[1], [0], [0], [1], [0, 0, 1, 1], [], []>} : vector<32x16xf32>, vector<16x16xf32>, vector<32x16xf32> -> vector<32x16xf32>
    %c0_4 = arith.constant 0 : index
    %c0_5 = arith.constant 0 : index
    %4 = vector.load %arg3[%c0_4, %c0_5] : memref<16x32xf32, #tpu.memory_space<vmem>>, vector<16x32xf32>
    %cst_6 = arith.constant dense<0.000000e+00> : vector<32x32xf32>
    %5 = tpu.matmul %3, %4, %cst_6 {dimension_numbers = #tpu.dot_dimension_numbers<[1], [0], [0], [1], [0, 0, 1, 1], [], []>} : vector<32x16xf32>, vector<16x32xf32>, vector<32x32xf32> -> vector<32x32xf32>
    %c0_7 = arith.constant 0 : index
    %c0_8 = arith.constant 0 : index
    %c0_9 = arith.constant 0 : index
    %6 = vector.load %arg4[%c0_7, %c0_8, %c0_9] : memref<1x32x32xf32, #tpu.memory_space<vmem>>, vector<1x32x32xf32>
    %7 = vector.shape_cast %6 : vector<1x32x32xf32> to vector<32x32xf32>
    %8 = vector.shape_cast %5 : vector<32x32xf32> to vector<1x32x32xf32>
    tpu.vector_store %arg4[%c0_7, %c0_8, %c0_9], %8 {strides = array<i32>} : memref<1x32x32xf32, #tpu.memory_space<vmem>>, vector<1x32x32xf32>,
    return
  }
  func.func @transform_0(%arg0: i32) -> (i32, i32, i32) {
    %c0_i32 = arith.constant 0 : i32
    %c0_i32_0 = arith.constant 0 : i32
    %c0_i32_1 = arith.constant 0 : i32
    return %arg0, %c0_i32, %c0_i32_0 : i32, i32, i32
  }
  func.func @transform_1(%arg0: i32) -> (i32, i32) {
    %c0_i32 = arith.constant 0 : i32
    %c0_i32_0 = arith.constant 0 : i32
    %c0_i32_1 = arith.constant 0 : i32
    return %c0_i32, %c0_i32_0 : i32, i32
  }
  func.func @transform_2(%arg0: i32) -> (i32, i32) {
    %c0_i32 = arith.constant 0 : i32
    %c0_i32_0 = arith.constant 0 : i32
    %c0_i32_1 = arith.constant 0 : i32
    return %c0_i32, %c0_i32_0 : i32, i32
  }
  func.func @transform_3(%arg0: i32) -> (i32, i32, i32) {
    %c0_i32 = arith.constant 0 : i32
    %c0_i32_0 = arith.constant 0 : i32
    %c0_i32_1 = arith.constant 0 : i32
    return %arg0, %c0_i32, %c0_i32_0 : i32, i32, i32
  }
}

</mosaic_0001>

<llo_original>
// kernel: tpu_custom_call.1
$region0: #{tpu_custom_call.1}
  #allocation0 [shape = 'u32[]', space=smem, size = 0x4, offset = 0x4, fixed_abs, tag = 'smem constant byte address 0x4 - core index']
  #allocation1 [shape = 'u32[72,128]{1,0:T(1,128)}', space=vmem, size = 0x9000, scoped, tag = 'internal scratch']
  %s0 = inlined_call_operand.hbm [shape: f32[8,16,16], index: 0, kind: input, shape index: {}]
  %s1 = inlined_call_operand.vmem [shape: f32[32,16], index: 1, kind: input, shape index: {}]
  %s2 = inlined_call_operand.vmem [shape: f32[16,32], index: 2, kind: input, shape index: {}]
  %s3 = inlined_call_operand.hbm [shape: f32[8,32,32], index: 3, kind: output, shape index: {}]
  %s4 = sld [smem:[#allocation0]]
  $region49: #{tpu_custom_call.1} parent=0
    _
  %s6 = ssub.s32 1, %s4
  %s7 = scalar_select 0, %s6, %s4
  $region1: #{tpu_custom_call.1} parent=0
    #allocation2 [shape = 'u8[16384]{0}', space=vmem, size = 0x4000, scoped, tag = 'input window, operand 0']
    #allocation3 [shape = 's32[2]{0}', space=sflag, size = 0x8, scoped, tag = 'scoped memory for tpu_custom_call.1']
    #allocation4 [shape = 's32[2]{0}', space=sflag, size = 0x8, scoped, tag = 'scoped memory for tpu_custom_call.1']
    #allocation5 [shape = 'u8[32768]{0}', space=vmem, size = 0x8000, scoped, tag = 'output window, operand 0']
    %8 = vsyncpa [#allocation3], 0
    %s9 = scalar_lea.sflag [#allocation3], 1
    %10 = vsyncpa %s9, 0
    %11 = vsyncpa [#allocation4], 0
    %s12 = scalar_lea.sflag [#allocation4], 1
    %13 = vsyncpa %s12, 0
    loop: start=0, step=1, limit=10
    $region2: #{tpu_custom_call.1} parent=1 // loop_pre_header
      _
    $region3: #{tpu_custom_call.1} parent=1 // loop_header
      %s15 = sphi 0, %s19
      %p16 = scmp.ge.s32.totalorder %s15, 10
      %s25 = sphi 0, %s27
      %s28 = sphi 0, %s25
      %s29 = sphi 0, %s28
      %s45 = sphi 0, %s29
      %s49 = sphi 0, %s49
      %s51 = sphi 0, %s49
      %s52 = sphi 0, %s51
      %s66 = sphi 0, %s52
      %s70 = sphi 0, %s70
      %s72 = sphi 0, %s70
      %s73 = sphi 0, %s72
      %s87 = sphi 0, %s73
      %s93 = sphi 0, %s95
      %s96 = sphi 0, %s93
      %s97 = sphi 0, %s96
      %s113 = sphi 0, %s97
    $region4: #{tpu_custom_call.1} parent=1 // loop_header_branch
      %18 = sbr.rel (%p16) target = $region8
    $region5: #{tpu_custom_call.1} parent=1 // loop_body
      %s20 = ssub.s32 %s15, 1
      %s21 = ssub.s32 %s15, 2
      %s22 = sadd.s32 %s15, 1
      %s23 = ssub.s32 %s15, %s22
      %p24 = scmp.eq.s32.totalorder %s23, 0
      %s26 = sadd.s32 %s25, 1
      %s27 = scalar_select %p24, %s25, %s26
      %p30 = pneg %p24
      %p31 = scmp.eq.s32.totalorder %s15, 7
      %p32 = por %p30, %p31
      %p33 = scmp.ne.s32.totalorder %s25, %s28
      %p34 = scmp.eq.s32.totalorder %s15, 0
      %p35 = por %p33, %p34
      %p36 = scmp.ne.s32.totalorder %s25, %s28
      %p37 = scmp.eq.s32.totalorder %s20, 7
      %p38 = por %p36, %p37
      %p39 = scmp.ne.s32.totalorder %s28, %s29
      %p40 = scmp.eq.s32.totalorder %s20, 0
      %p41 = por %p39, %p40
      %p42 = scmp.ne.s32.totalorder %s28, %s29
      %p43 = scmp.eq.s32.totalorder %s21, 7
      %p44 = por %p42, %p43
      %p46 = scmp.ne.s32.totalorder %s29, %s45
      %p47 = scmp.eq.s32.totalorder %s21, 0
      %p48 = por %p46, %p47
      %s50 = sadd.s32 %s49, 1
      %p53 = scmp.eq.s32.totalorder %s15, 7
      %p54 = scmp.ne.s32.totalorder %s49, %s51
      %p55 = scmp.eq.s32.totalorder %s15, 0
      %p56 = por %p54, %p55
      %p57 = scmp.ne.s32.totalorder %s49, %s51
      %p58 = scmp.eq.s32.totalorder %s20, 7
      %p59 = por %p57, %p58
      %p60 = scmp.ne.s32.totalorder %s51, %s52
      %p61 = scmp.eq.s32.totalorder %s20, 0
      %p62 = por %p60, %p61
      %p63 = scmp.ne.s32.totalorder %s51, %s52
      %p64 = scmp.eq.s32.totalorder %s21, 7
      %p65 = por %p63, %p64
      %p67 = scmp.ne.s32.totalorder %s52, %s66
      %p68 = scmp.eq.s32.totalorder %s21, 0
      %p69 = por %p67, %p68
      %s71 = sadd.s32 %s70, 1
      %p74 = scmp.eq.s32.totalorder %s15, 7
      %p75 = scmp.ne.s32.totalorder %s70, %s72
      %p76 = scmp.eq.s32.totalorder %s15, 0
      %p77 = por %p75, %p76
      %p78 = scmp.ne.s32.totalorder %s70, %s72
      %p79 = scmp.eq.s32.totalorder %s20, 7
      %p80 = por %p78, %p79
      %p81 = scmp.ne.s32.totalorder %s72, %s73
      %p82 = scmp.eq.s32.totalorder %s20, 0
      %p83 = por %p81, %p82
      %p84 = scmp.ne.s32.totalorder %s72, %s73
      %p85 = scmp.eq.s32.totalorder %s21, 7
      %p86 = por %p84, %p85
      %p88 = scmp.ne.s32.totalorder %s73, %s87
      %p89 = scmp.eq.s32.totalorder %s21, 0
      %p90 = por %p88, %p89
      %s91 = ssub.s32 %s15, %s22
      %p92 = scmp.eq.s32.totalorder %s91, 0
      %s94 = sadd.s32 %s93, 1
      %s95 = scalar_select %p92, %s93, %s94
      %p98 = pneg %p92
      %p99 = scmp.eq.s32.totalorder %s15, 7
      %p100 = por %p98, %p99
      %p101 = scmp.ne.s32.totalorder %s93, %s96
      %p102 = scmp.eq.s32.totalorder %s15, 0
      %p103 = por %p101, %p102
      %p104 = scmp.ne.s32.totalorder %s93, %s96
      %p105 = scmp.eq.s32.totalorder %s20, 7
      %p106 = por %p104, %p105
      %p107 = scmp.ne.s32.totalorder %s96, %s97
      %p108 = scmp.eq.s32.totalorder %s20, 0
      %p109 = por %p107, %p108
      %p110 = scmp.ne.s32.totalorder %s96, %s97
      %p111 = scmp.eq.s32.totalorder %s21, 7
      %p112 = por %p110, %p111
      %p114 = scmp.ne.s32.totalorder %s97, %s113
      %p115 = scmp.eq.s32.totalorder %s21, 0
      %p116 = por %p114, %p115
      %p117 = scmp.le.s32.totalorder 1, %s15
      %p118 = scmp.lt.s32.totalorder %s15, 9
      %p119 = pnand %p117, %p118
      %p120 = pneg %p119
      // Predicated region
      $region9: #{tpu_custom_call.1} parent=5 // pred_check
        _
      $region10: #{tpu_custom_call.1} parent=5 // pred_check_branch
        %122 = sbr.rel (%p119) target = $region12
      $region11: #{tpu_custom_call.1} parent=5 // pred_region
        %s123 = ssub.s32 %s15, 1
        // Predicated region
        $region13: #{tpu_custom_call.1} parent=11 // pred_check
          %p124 = pneg %p62
        $region14: #{tpu_custom_call.1} parent=11 // pred_check_branch
          %126 = sbr.rel (%p124) target = $region16
        $region15: #{tpu_custom_call.1} parent=11 // pred_region
          _
        $region16: #{tpu_custom_call.1} parent=11 // pred_fallthru
          _
        // Predicated region
        $region17: #{tpu_custom_call.1} parent=11 // pred_check
          %p127 = pneg %p83
        $region18: #{tpu_custom_call.1} parent=11 // pred_check_branch
          %129 = sbr.rel (%p127) target = $region20
        $region19: #{tpu_custom_call.1} parent=11 // pred_region
          _
        $region20: #{tpu_custom_call.1} parent=11 // pred_fallthru
          _
      $region12: #{tpu_custom_call.1} parent=5 // pred_fallthru
        _
      %p130 = scmp.lt.s32.totalorder %s15, 8
      // Predicated region
      $region21: #{tpu_custom_call.1} parent=5 // pred_check
        %p131 = pneg %p130
      $region22: #{tpu_custom_call.1} parent=5 // pred_check_branch
        %133 = sbr.rel (%p131) target = $region24
      $region23: #{tpu_custom_call.1} parent=5 // pred_region
        // Predicated region
        $region25: #{tpu_custom_call.1} parent=23 // pred_check
          %p134 = pneg %p35
        $region26: #{tpu_custom_call.1} parent=23 // pred_check_branch
          %136 = sbr.rel (%p134) target = $region28
        $region27: #{tpu_custom_call.1} parent=23 // pred_region
          %s137 = sand.u32 %s25, 1
          %s138 = scalar_lea.sflag [#allocation3], %s137
          %s139 = sand.u32 %s25, 1
          %s140 = smul.addr %s139, 16
          %s141 = scalar_lea.vmem [#allocation2], %s140
          %143 = vsyncadd %s138, 0
          %s144 = smul.addr %s15, 2
          %s145 = smul.addr %s144, 8
          %s146 = scalar_lea.hbm %s0, %s145
          %s147 = sshll.u32 %s146, 4
          %s148 = int_to_ptr.hbm [resolvable:$true] %s147
          %s149 = sshll.u32 %s141, 4
          %s150 = int_to_ptr.vmem [resolvable:$true] %s149
          %155 = dma.hbm_to_vmem [thread:$0]  %s148, 256, %s150, %s138, 128, 128, 8
        $region28: #{tpu_custom_call.1} parent=23 // pred_fallthru
          _
      $region24: #{tpu_custom_call.1} parent=5 // pred_fallthru
        _
      %p156 = scmp.le.s32.totalorder 1, %s15
      %p157 = scmp.lt.s32.totalorder %s15, 9
      %p158 = pnand %p156, %p157
      %p159 = pneg %p158
      // Predicated region
      $region29: #{tpu_custom_call.1} parent=5 // pred_check
        _
      $region30: #{tpu_custom_call.1} parent=5 // pred_check_branch
        %161 = sbr.rel (%p158) target = $region32
      $region31: #{tpu_custom_call.1} parent=5 // pred_region
        %s162 = ssub.s32 %s15, 1
        %s163 = sand.u32 %s28, 1
        %s164 = scalar_lea.sflag [#allocation3], %s163
        %s165 = sand.u32 %s28, 1
        %s166 = smul.addr %s165, 16
        %s167 = scalar_lea.vmem [#allocation2], %s166
        // Predicated region
        $region33: #{tpu_custom_call.1} parent=31 // pred_check
          %p168 = pneg %p41
        $region34: #{tpu_custom_call.1} parent=31 // pred_check_branch
          %170 = sbr.rel (%p168) target = $region36
        $region35: #{tpu_custom_call.1} parent=31 // pred_region
          %172 = dma.done %s164, 256
        $region36: #{tpu_custom_call.1} parent=31 // pred_fallthru
          _
        %s173 = sand.u32 %s28, 1
        %s174 = scalar_lea.sflag [#allocation3], %s173
        %s175 = sand.u32 %s28, 1
        %s176 = smul.addr %s175, 16
        %s177 = scalar_lea.vmem [#allocation2], %s176
        %p178 = pneg %p41
        %p179 = pneg %p38
        %p180 = pneg %p62
        %p181 = pneg %p59
        %p182 = pneg %p83
        %p183 = pneg %p80
        %p184 = pneg %p109
        %p185 = pneg %p106
        %s186 = sand.u32 %s96, 1
        %s187 = scalar_lea.sflag [#allocation4], %s186
        %s188 = sand.u32 %s96, 1
        %s189 = smul.addr %s188, 32
        %s190 = scalar_lea.vmem [#allocation5], %s189
        %v191 = vld [vmem:[%s167] sm:$0xff]
        %v192 = vld [vmem:[%s167 + $0x8] sm:$0xff]
        %v193 = vld [vmem:[%s1] sm:$0xff]
        %v194 = vld [vmem:[%s1 + $0x8] sm:$0xff]
        %v195 = vld [vmem:[%s1 + $0x10] sm:$0xff]
        %v196 = vld [vmem:[%s1 + $0x18] sm:$0xff]
        %vm197 = vcmask 130048
        %v199 = vsel %vm197, %v193, 0
        %v202 = vsel %vm197, %v194, 0
        %v205 = vsel %vm197, %v195, 0
        %v208 = vsel %vm197, %v196, 0
        %210 = vmatpush.msra.mxu0 0.0
        %211 = vmatpush.msra.mxu0 0.0
        %212 = vmatpush.msra.mxu0 0.0
        %213 = vmatpush.msra.mxu0 0.0
        %214 = vmatpush.msra.mxu0 0.0
        %215 = vmatpush.msra.mxu0 0.0
        %216 = vmatpush.msra.mxu0 0.0
        %217 = vmatpush.msra.mxu0 0.0
        %218 = vmatpush.msra.mxu0 0.0
        %219 = vmatpush.msra.mxu0 0.0
        %220 = vmatpush.msra.mxu0 0.0
        %221 = vmatpush.msra.mxu0 0.0
        %222 = vmatpush.msra.mxu0 0.0
        %223 = vmatpush.msra.mxu0 0.0
        %224 = vmatpush.msra.mxu0 %v192
        %225 = vmatpush.msra.mxu0 %v191
        %226 = vmatmul.f32.gmra.mxu0 %v199
        %v227 = vpop.f32.mrf.mxu0
        %v228 = vadd.f32 0.0, %v227
        %229 = vmatmul.f32.gmra.mxu0 %v202
        %v230 = vpop.f32.mrf.mxu0
        %v231 = vadd.f32 0.0, %v230
        %232 = vmatmul.f32.gmra.mxu0 %v205
        %v233 = vpop.f32.mrf.mxu0
        %v234 = vadd.f32 0.0, %v233
        %235 = vmatmul.f32.gmra.mxu0 %v208
        %v236 = vpop.f32.mrf.mxu0
        %v237 = vadd.f32 0.0, %v236
        %238 = vdwg.mxu0
        %v239 = vld [vmem:[%s2] sm:$0xff]
        %v240 = vld [vmem:[%s2 + $0x8] sm:$0xff]
        %v242 = vsel %vm197, %v228, 0
        %v245 = vsel %vm197, %v231, 0
        %v248 = vsel %vm197, %v234, 0
        %v251 = vsel %vm197, %v237, 0
        %253 = vmatpush.msra.mxu0 0.0
        %254 = vmatpush.msra.mxu0 0.0
        %255 = vmatpush.msra.mxu0 0.0
        %256 = vmatpush.msra.mxu0 0.0
        %257 = vmatpush.msra.mxu0 0.0
        %258 = vmatpush.msra.mxu0 0.0
        %259 = vmatpush.msra.mxu0 0.0
        %260 = vmatpush.msra.mxu0 0.0
        %261 = vmatpush.msra.mxu0 0.0
        %262 = vmatpush.msra.mxu0 0.0
        %263 = vmatpush.msra.mxu0 0.0
        %264 = vmatpush.msra.mxu0 0.0
        %265 = vmatpush.msra.mxu0 0.0
        %266 = vmatpush.msra.mxu0 0.0
        %267 = vmatpush.msra.mxu0 %v240
        %268 = vmatpush.msra.mxu0 %v239
        %269 = vmatmul.f32.gmra.mxu0 %v242
        %v270 = vpop.f32.mrf.mxu0
        %v271 = vadd.f32 0.0, %v270
        %272 = vmatmul.f32.gmra.mxu0 %v245
        %v273 = vpop.f32.mrf.mxu0
        %v274 = vadd.f32 0.0, %v273
        %275 = vmatmul.f32.gmra.mxu0 %v248
        %v276 = vpop.f32.mrf.mxu0
        %v277 = vadd.f32 0.0, %v276
        %278 = vmatmul.f32.gmra.mxu0 %v251
        %v279 = vpop.f32.mrf.mxu0
        %v280 = vadd.f32 0.0, %v279
        %281 = vdwg.mxu0
        %vm282 = vcmask 261120
        %283 = vst.msk [vmem:[%s190] sm:$0xff] %vm282, %v271
        %284 = vst.msk [vmem:[%s190 + $0x8] sm:$0xff] %vm282, %v274
        %285 = vst.msk [vmem:[%s190 + $0x10] sm:$0xff] %vm282, %v277
        %286 = vst.msk [vmem:[%s190 + $0x18] sm:$0xff] %vm282, %v280
        %s287 = sand.u32 %s96, 1
        %s288 = scalar_lea.sflag [#allocation4], %s287
        %s289 = sand.u32 %s96, 1
        %s290 = smul.addr %s289, 32
        %s291 = scalar_lea.vmem [#allocation5], %s290
        // Predicated region
        $region37: #{tpu_custom_call.1} parent=31 // pred_check
          %p292 = pneg %p106
        $region38: #{tpu_custom_call.1} parent=31 // pred_check_branch
          %294 = sbr.rel (%p292) target = $region40
        $region39: #{tpu_custom_call.1} parent=31 // pred_region
          %296 = vsyncadd %s288, 0
          %s297 = smul.addr %s20, 4
          %s298 = smul.addr %s297, 8
          %s299 = scalar_lea.hbm %s3, %s298
          %s300 = sshll.u32 %s291, 4
          %s301 = int_to_ptr.vmem [resolvable:$true] %s300
          %s302 = sshll.u32 %s299, 4
          %s303 = int_to_ptr.hbm [resolvable:$true] %s302
          %308 = dma.vmem_to_hbm [thread:$0]  %s301, 512, %s303, %s288, 128, 128, 8
        $region40: #{tpu_custom_call.1} parent=31 // pred_fallthru
          _
      $region32: #{tpu_custom_call.1} parent=5 // pred_fallthru
        _
      %p309 = scmp.le.s32.totalorder 2, %s15
      // Predicated region
      $region41: #{tpu_custom_call.1} parent=5 // pred_check
        %p310 = pneg %p309
      $region42: #{tpu_custom_call.1} parent=5 // pred_check_branch
        %312 = sbr.rel (%p310) target = $region44
      $region43: #{tpu_custom_call.1} parent=5 // pred_region
        %s313 = ssub.s32 %s15, 2
        // Predicated region
        $region45: #{tpu_custom_call.1} parent=43 // pred_check
          %p314 = pneg %p112
        $region46: #{tpu_custom_call.1} parent=43 // pred_check_branch
          %316 = sbr.rel (%p314) target = $region48
        $region47: #{tpu_custom_call.1} parent=43 // pred_region
          %s317 = sand.u32 %s97, 1
          %s318 = scalar_lea.sflag [#allocation4], %s317
          %s319 = sand.u32 %s97, 1
          %s320 = smul.addr %s319, 32
          %s321 = scalar_lea.vmem [#allocation5], %s320
          %323 = dma.done %s318, 512
        $region48: #{tpu_custom_call.1} parent=43 // pred_fallthru
          _
      $region44: #{tpu_custom_call.1} parent=5 // pred_fallthru
        _
    $region6: #{tpu_custom_call.1} parent=1 // loop_footer
      %s19 = sadd.s32 1, %s15
    $region7: #{tpu_custom_call.1} parent=1 // loop_footer_branch
      %14 = sbr.rel target = $region3
    $region8: #{tpu_custom_call.1} parent=1 // loop_exit
      _
    %324 = vsyncpa [#allocation3], 1
    %s325 = scalar_lea.sflag [#allocation3], 1
    %326 = vsyncpa %s325, 1
    %327 = vsyncpa [#allocation4], 1
    %s328 = scalar_lea.sflag [#allocation4], 1
    %329 = vsyncpa %s328, 1

</llo_original>
